<compile_context>
chip_gen: v5e
topology: v5e:2x2
jax: 0.10.0
libtpu: 0.0.40
codegen_flags: <defaults>
</compile_context>

<pallas_src>
import functools

import jax
import jax.numpy as jnp
from jax.experimental import pallas as pl
from jax.experimental.pallas import tpu as pltpu

LANE = 128          # TPU lane width
SUBLANE = 8         # TPU sublane width
VMEM_BUDGET = 24 << 20  # leave headroom under the 32 MiB scoped-VMEM default


def _round_up(n, m):
    return ((n + m - 1) // m) * m


def mlp_kernel(x_ref, w1_ref, b1_ref, w2_ref, b2_ref, probs_ref, logits_ref,
               *, out_size, matmul_dtype):
    # dense1: Dropout (identity at eval) + Linear(in_size -> fil_num_padded)
    x = x_ref[...].astype(matmul_dtype)
    h = jnp.dot(x, w1_ref[...], preferred_element_type=jnp.float32) + b1_ref[...]

    # dense2: LeakyReLU (negative_slope=0.01, PyTorch default) + Dropout
    # (identity) + Linear(fil_num_padded -> out_size_padded).
    # Elementwise kept in f32 (safe on v5e's VPU).
    h = jnp.where(h > 0, h, 0.01 * h)

    z = jnp.dot(h.astype(matmul_dtype), w2_ref[...],
                preferred_element_type=jnp.float32) + b2_ref[...]
    logits_ref[...] = z.astype(logits_ref.dtype)  # lane-dense (padded to 128)

    # Softmax(dim=1) over the real lanes only: padded lanes -> -inf so they
    # contribute exp(.) = 0 and probabilities are unchanged.
    lane = jax.lax.broadcasted_iota(jnp.int32, z.shape, dimension=1)
    z_m = jnp.where(lane < out_size, z, -jnp.inf)
    m = jnp.max(z_m, axis=1, keepdims=True)
    e = jnp.exp(z_m - m)
    inv = pl.reciprocal(jnp.sum(e, axis=1, keepdims=True), approx=True)  # EUP
    probs_ref[...] = (e * inv).astype(probs_ref.dtype)


def _pick_tile_b(B, in_size, out_p, fil_p, matmul_dtype, tile_b_max):
    """Largest batch tile (multiple of 8) that keeps double-buffered tiles +
    resident weights inside the VMEM budget."""
    in_bytes = jnp.dtype(matmul_dtype).itemsize
    resident = (in_size * fil_p + fil_p * out_p) * in_bytes + (fil_p + out_p) * 4
    # per-row: x tile (double-buffered) + probs/logits tiles (double-buffered)
    per_row = 2 * in_size * in_bytes + 2 * 2 * out_p * 4
    tile_b = max(SUBLANE, (VMEM_BUDGET - resident) // max(per_row, 1))
    tile_b = (tile_b // SUBLANE) * SUBLANE
    tile_b = min(tile_b, tile_b_max, _round_up(B, SUBLANE))
    return max(tile_b, SUBLANE)


def mlp_forward(x, w1, b1, w2, b2, *, matmul_dtype=jnp.float32, tile_b_max=1024):
    """x: (B, in_size); w1: (in_size, fil_num); b1: (fil_num,);
    w2: (fil_num, out_size); b2: (out_size,).  Returns (probs, logits),
    each of shape (B, out_size), float32."""
    B, in_size = x.shape
    fil_num = w1.shape[1]
    out_size = w2.shape[1]

    # Pad hidden / output dims to full 128-lane tiles. Zero-padded hidden
    # units are exact no-ops through LeakyReLU and the second matmul; padded
    # logit lanes are masked to -inf in the kernel before the softmax.
    fil_p = _round_up(fil_num, LANE)
    out_p = _round_up(out_size, LANE)
    w1p = jnp.zeros((in_size, fil_p), matmul_dtype).at[:, :fil_num].set(
        w1.astype(matmul_dtype))
    b1p = jnp.zeros((1, fil_p), jnp.float32).at[:, :fil_num].set(b1)
    w2p = jnp.zeros((fil_p, out_p), matmul_dtype).at[:fil_num, :out_size].set(
        w2.astype(matmul_dtype))
    b2p = jnp.zeros((1, out_p), jnp.float32).at[:, :out_size].set(b2)

    # Batch tiling: biggest tile that fits the VMEM budget; pad B so the grid
    # divides evenly (padded rows are computed then discarded; no NaNs).
    tile_b = _pick_tile_b(B, in_size, out_p, fil_p, matmul_dtype, tile_b_max)
    Bp = _round_up(B, tile_b)
    xp = x.astype(matmul_dtype)
    if Bp != B:
        xp = jnp.pad(xp, ((0, Bp - B), (0, 0)))
    n_blocks = Bp // tile_b

    kernel = functools.partial(mlp_kernel, out_size=out_size,
                               matmul_dtype=matmul_dtype)

    # Weights/biases: full-array blocks with a constant index_map -> DMA'd
    # once, VMEM-resident across all grid steps (not re-fetched per tile).
    resident = lambda arr: pl.BlockSpec(arr.shape, lambda i: (0, 0))

    probs, logits = pl.pallas_call(
        kernel,
        out_shape=(
            jax.ShapeDtypeStruct((Bp, out_p), jnp.float32),
            jax.ShapeDtypeStruct((Bp, out_p), jnp.float32),
        ),
        grid=(n_blocks,),
        in_specs=[
            pl.BlockSpec((tile_b, in_size), lambda i: (i, 0)),  # x, pipelined
            resident(w1p),
            resident(b1p),
            resident(w2p),
            resident(b2p),
        ],
        out_specs=(
            pl.BlockSpec((tile_b, out_p), lambda i: (i, 0)),
            pl.BlockSpec((tile_b, out_p), lambda i: (i, 0)),
        ),
        compiler_params=pltpu.CompilerParams(
            dimension_semantics=("parallel",),  # megacore sharding on v7x
        ),
    )(xp, w1p, b1p, w2p, b2p)

    return probs[:B, :out_size], logits[:B, :out_size]


def init_params(key, in_size, fil_num, out_size):
    """Deterministic init mimicking nn.Linear's uniform(-1/sqrt(fan_in), +)."""
    k1, k2, k3, k4 = jax.random.split(key, 4)
    lim1 = 1.0 / jnp.sqrt(jnp.float32(in_size))
    lim2 = 1.0 / jnp.sqrt(jnp.float32(fil_num))
    # stored already transposed: (in, out)
    w1 = jax.random.uniform(k1, (in_size, fil_num), jnp.float32, -lim1, lim1)
    b1 = jax.random.uniform(k2, (fil_num,), jnp.float32, -lim1, lim1)
    w2 = jax.random.uniform(k3, (fil_num, out_size), jnp.float32, -lim2, lim2)
    b2 = jax.random.uniform(k4, (out_size,), jnp.float32, -lim2, lim2)
    return w1, b1, w2, b2


if __name__ == "__main__":
    # small shapes consistent with the module: config = {fil_num, drop_rate, out_size}
    B, in_size, fil_num, out_size = 8, 32, 16, 4

    key = jax.random.PRNGKey(0)
    kx, kp = jax.random.split(key)
    x = jax.random.normal(kx, (B, in_size), jnp.float32)
    w1, b1, w2, b2 = init_params(kp, in_size, fil_num, out_size)

    # f32 path (default)
    probs, logits = mlp_forward(x, w1, b1, w2, b2)
    jax.block_until_ready((probs, logits))

    # reference check in plain JAX
    h_ref = x @ w1 + b1
    h_ref = jnp.where(h_ref > 0, h_ref, 0.01 * h_ref)
    z_ref = h_ref @ w2 + b2
    p_ref = jax.nn.softmax(z_ref, axis=1)
    assert jnp.allclose(logits, z_ref, atol=1e-5), "logits mismatch"
    assert jnp.allclose(probs, p_ref, atol=5e-3), "softmax mismatch"

    # bf16 matmul path (v6e/v7x MXU datapath, halved DMA bytes); f32 accumulate.
    probs_bf, logits_bf = mlp_forward(x, w1, b1, w2, b2, matmul_dtype=jnp.bfloat16)
    jax.block_until_ready((probs_bf, logits_bf))
    assert jnp.allclose(logits_bf, z_ref, atol=1e-1), "bf16 logits mismatch"
    assert jnp.allclose(probs_bf, p_ref, atol=1e-1), "bf16 softmax mismatch"

    print("KERNEL_OK")
</pallas_src>

<mosaic_0001>
module attributes {stable_mosaic.version = 11 : i64} {
  func.func @mlp_kernel(%arg0: i32, %arg1: memref<8x32xf32, #tpu.memory_space<vmem>>, %arg2: memref<32x128xf32, #tpu.memory_space<vmem>>, %arg3: memref<1x128xf32, #tpu.memory_space<vmem>>, %arg4: memref<128x128xf32, #tpu.memory_space<vmem>>, %arg5: memref<1x128xf32, #tpu.memory_space<vmem>>, %arg6: memref<8x128xf32, #tpu.memory_space<vmem>>, %arg7: memref<8x128xf32, #tpu.memory_space<vmem>>) attributes {dimension_semantics = [#tpu.dimension_semantics<parallel>], iteration_bounds = array<i64: 1>, scalar_prefetch = 0 : i64, scratch_operands = 0 : i64, tpu.core_type = #tpu.core_type<tc>, window_params = [{transform_indices = @transform_0, window_bounds = array<i64: 8, 32>}, {pipeline_mode = #tpu.pipeline_mode<synchronous>, transform_indices = @transform_1, window_bounds = array<i64: 32, 128>}, {pipeline_mode = #tpu.pipeline_mode<synchronous>, transform_indices = @transform_2, window_bounds = array<i64: 1, 128>}, {pipeline_mode = #tpu.pipeline_mode<synchronous>, transform_indices = @transform_3, window_bounds = array<i64: 128, 128>}, {pipeline_mode = #tpu.pipeline_mode<synchronous>, transform_indices = @transform_4, window_bounds = array<i64: 1, 128>}, {transform_indices = @transform_5, window_bounds = array<i64: 8, 128>}, {transform_indices = @transform_6, window_bounds = array<i64: 8, 128>}]} {
    %c0 = arith.constant 0 : index
    %c0_0 = arith.constant 0 : index
    %0 = vector.load %arg1[%c0, %c0_0] : memref<8x32xf32, #tpu.memory_space<vmem>>, vector<8x32xf32>
    %c0_1 = arith.constant 0 : index
    %c0_2 = arith.constant 0 : index
    %1 = vector.load %arg2[%c0_1, %c0_2] : memref<32x128xf32, #tpu.memory_space<vmem>>, vector<32x128xf32>
    %cst = arith.constant dense<0.000000e+00> : vector<8x128xf32>
    %2 = tpu.matmul %0, %1, %cst {dimension_numbers = #tpu.dot_dimension_numbers<[1], [0], [0], [1], [0, 0, 1, 1], [], []>} : vector<8x32xf32>, vector<32x128xf32>, vector<8x128xf32> -> vector<8x128xf32>
    %c0_3 = arith.constant 0 : index
    %c0_4 = arith.constant 0 : index
    %3 = vector.load %arg3[%c0_3, %c0_4] : memref<1x128xf32, #tpu.memory_space<vmem>>, vector<1x128xf32>
    %4 = vector.broadcast %3 : vector<1x128xf32> to vector<8x128xf32>
    %5 = arith.addf %2, %4 : vector<8x128xf32>
    %cst_5 = arith.constant 0.000000e+00 : f32
    %6 = vector.broadcast %cst_5 : f32 to vector<8x128xf32>
    %7 = arith.cmpf ogt, %5, %6 : vector<8x128xf32>
    %cst_6 = arith.constant 0.00999999977 : f32
    %8 = vector.broadcast %cst_6 : f32 to vector<8x128xf32>
    %9 = arith.mulf %8, %5 : vector<8x128xf32>
    %10 = arith.select %7, %5, %9 : vector<8x128xi1>, vector<8x128xf32>
    %c0_7 = arith.constant 0 : index
    %c0_8 = arith.constant 0 : index
    %11 = vector.load %arg4[%c0_7, %c0_8] : memref<128x128xf32, #tpu.memory_space<vmem>>, vector<128x128xf32>
    %cst_9 = arith.constant dense<0.000000e+00> : vector<8x128xf32>
    %12 = tpu.matmul %10, %11, %cst_9 {dimension_numbers = #tpu.dot_dimension_numbers<[1], [0], [0], [1], [0, 0, 1, 1], [], []>} : vector<8x128xf32>, vector<128x128xf32>, vector<8x128xf32> -> vector<8x128xf32>
    %c0_10 = arith.constant 0 : index
    %c0_11 = arith.constant 0 : index
    %13 = vector.load %arg5[%c0_10, %c0_11] : memref<1x128xf32, #tpu.memory_space<vmem>>, vector<1x128xf32>
    %14 = vector.broadcast %13 : vector<1x128xf32> to vector<8x128xf32>
    %15 = arith.addf %12, %14 : vector<8x128xf32>
    %c0_12 = arith.constant 0 : index
    %c0_13 = arith.constant 0 : index
    %16 = vector.load %arg7[%c0_12, %c0_13] : memref<8x128xf32, #tpu.memory_space<vmem>>, vector<8x128xf32>
    tpu.vector_store %arg7[%c0_12, %c0_13], %15 {strides = array<i32>} : memref<8x128xf32, #tpu.memory_space<vmem>>, vector<8x128xf32>,
    %17 = tpu.iota {dimensions = array<i32: 1>} : vector<8x128xi32>
    %c4_i32 = arith.constant 4 : i32
    %18 = vector.broadcast %c4_i32 : i32 to vector<8x128xi32>
    %19 = arith.cmpi slt, %17, %18 : vector<8x128xi32>
    %cst_14 = arith.constant 0xFF800000 : f32
    %20 = vector.broadcast %cst_14 : f32 to vector<8x128xf32>
    %21 = arith.select %19, %15, %20 : vector<8x128xi1>, vector<8x128xf32>
    %cst_15 = arith.constant dense<0xFF800000> : vector<8xf32>
    %22 = vector.multi_reduction <maximumf>, %21, %cst_15 [1] : vector<8x128xf32> to vector<8xf32>
    %23 = vector.shape_cast %22 : vector<8xf32> to vector<8x1xf32>
    %24 = vector.broadcast %23 : vector<8x1xf32> to vector<8x128xf32>
    %25 = arith.subf %21, %24 : vector<8x128xf32>
    %26 = math.exp %25 : vector<8x128xf32>
    %cst_16 = arith.constant dense<0.000000e+00> : vector<8xf32>
    %27 = vector.multi_reduction <add>, %26, %cst_16 [1] : vector<8x128xf32> to vector<8xf32>
    %28 = vector.shape_cast %27 : vector<8xf32> to vector<8x1xf32>
    %29 = tpu.reciprocal %28 {approx = true} : vector<8x1xf32> -> vector<8x1xf32>
    %30 = vector.broadcast %29 : vector<8x1xf32> to vector<8x128xf32>
    %31 = arith.mulf %26, %30 : vector<8x128xf32>
    %c0_17 = arith.constant 0 : index
    %c0_18 = arith.constant 0 : index
    %32 = vector.load %arg6[%c0_17, %c0_18] : memref<8x128xf32, #tpu.memory_space<vmem>>, vector<8x128xf32>
    tpu.vector_store %arg6[%c0_17, %c0_18], %31 {strides = array<i32>} : memref<8x128xf32, #tpu.memory_space<vmem>>, vector<8x128xf32>,
    return
  }
  func.func @transform_0(%arg0: i32) -> (i32, i32) {
    %c0_i32 = arith.constant 0 : i32
    %c0_i32_0 = arith.constant 0 : i32
    return %arg0, %c0_i32 : i32, i32
  }
  func.func @transform_1(%arg0: i32) -> (i32, i32) {
    %c0_i32 = arith.constant 0 : i32
    %c0_i32_0 = arith.constant 0 : i32
    %c0_i32_1 = arith.constant 0 : i32
    return %c0_i32, %c0_i32_0 : i32, i32
  }
  func.func @transform_2(%arg0: i32) -> (i32, i32) {
    %c0_i32 = arith.constant 0 : i32
    %c0_i32_0 = arith.constant 0 : i32
    %c0_i32_1 = arith.constant 0 : i32
    return %c0_i32, %c0_i32_0 : i32, i32
  }
  func.func @transform_3(%arg0: i32) -> (i32, i32) {
    %c0_i32 = arith.constant 0 : i32
    %c0_i32_0 = arith.constant 0 : i32
    %c0_i32_1 = arith.constant 0 : i32
    return %c0_i32, %c0_i32_0 : i32, i32
  }
  func.func @transform_4(%arg0: i32) -> (i32, i32) {
    %c0_i32 = arith.constant 0 : i32
    %c0_i32_0 = arith.constant 0 : i32
    %c0_i32_1 = arith.constant 0 : i32
    return %c0_i32, %c0_i32_0 : i32, i32
  }
  func.func @transform_5(%arg0: i32) -> (i32, i32) {
    %c0_i32 = arith.constant 0 : i32
    %c0_i32_0 = arith.constant 0 : i32
    return %arg0, %c0_i32 : i32, i32
  }
  func.func @transform_6(%arg0: i32) -> (i32, i32) {
    %c0_i32 = arith.constant 0 : i32
    %c0_i32_0 = arith.constant 0 : i32
    return %arg0, %c0_i32 : i32, i32
  }
}

</mosaic_0001>

<llo_original>
// kernel: tpu_custom_call.1
$region0: #{tpu_custom_call.1}
  #allocation0 [shape = 'u32[]', space=smem, size = 0x4, offset = 0x4, fixed_abs, tag = 'smem constant byte address 0x4 - core index']
  #allocation1 [shape = 'u32[72,128]{1,0:T(1,128)}', space=vmem, size = 0x9000, scoped, tag = 'internal scratch']
  %s0 = inlined_call_operand.hbm [shape: f32[8,32], index: 0, kind: input, shape index: {}]
  %s1 = inlined_call_operand.hbm [shape: f32[32,128], index: 1, kind: input, shape index: {}]
  %s2 = inlined_call_operand.vmem [shape: f32[1,128], index: 2, kind: input, shape index: {}]
  %s3 = inlined_call_operand.hbm [shape: f32[128,128], index: 3, kind: input, shape index: {}]
  %s4 = inlined_call_operand.vmem [shape: f32[1,128], index: 4, kind: input, shape index: {}]
  %s5 = inlined_call_operand.hbm [shape: f32[8,128], index: 5, kind: output, shape index: {0}]
  %s6 = inlined_call_operand.hbm [shape: f32[8,128], index: 6, kind: output, shape index: {1}]
  %7 = xla_tuple %s5, %s6
  %s8 = sld [smem:[#allocation0]]
  $region50: #{tpu_custom_call.1} parent=0
    _
  %s10 = ssub.s32 1, %s8
  %s11 = scalar_select 0, %s10, %s8
  $region1: #{tpu_custom_call.1} parent=0
    #allocation2 [shape = 'u8[4096]{0}', space=vmem, size = 0x1000, scoped, tag = 'input window, operand 0, single buffered']
    #allocation3 [shape = 's32[1]{0}', space=sflag, size = 0x4, scoped, tag = 'scoped memory for tpu_custom_call.1']
    #allocation4 [shape = 's32[1]{0}', space=sflag, size = 0x4, scoped, tag = 'scoped memory for tpu_custom_call.1']
    #allocation5 [shape = 'u8[16384]{0}', space=vmem, size = 0x4000, scoped, tag = 'input window, operand 1, single buffered']
    #allocation6 [shape = 's32[1]{0}', space=sflag, size = 0x4, scoped, tag = 'scoped memory for tpu_custom_call.1']
    #allocation7 [shape = 'u8[65536]{0}', space=vmem, size = 0x10000, scoped, tag = 'input window, operand 3, single buffered']
    #allocation8 [shape = 'u8[4096]{0}', space=vmem, size = 0x1000, scoped, tag = 'output window, operand 0, single buffered']
    #allocation9 [shape = 'u8[4096]{0}', space=vmem, size = 0x1000, scoped, tag = 'output window, operand 1, single buffered']
    #allocation10 [shape = 's32[1]{0}', space=sflag, size = 0x4, scoped, tag = 'scoped memory for tpu_custom_call.1']
    %12 = vsyncpa [#allocation3], 0
    %13 = vsyncpa [#allocation6], 0
    %14 = vsyncpa [#allocation4], 0
    %15 = vsyncpa [#allocation10], 0
    // Predicated region
    $region2: #{tpu_custom_call.1} parent=1 // pred_check
      _
    $region3: #{tpu_custom_call.1} parent=1 // pred_check_branch
      %17 = sbr.rel (0) target = $region5
    $region4: #{tpu_custom_call.1} parent=1 // pred_region
      %19 = vsyncadd [#allocation3], 0
      %s21 = sshll.u32 %s0, 4
      %s22 = int_to_ptr.hbm [resolvable:$true] %s21
      %s23 = sshll.u32 [#allocation2], 4
      %s24 = int_to_ptr.vmem [resolvable:$true] %s23
      %26 = dma.hbm_to_vmem [thread:$0]  %s22, 128, %s24, [#allocation3]
    $region5: #{tpu_custom_call.1} parent=1 // pred_fallthru
      _
    // Predicated region
    $region6: #{tpu_custom_call.1} parent=1 // pred_check
      _
    $region7: #{tpu_custom_call.1} parent=1 // pred_check_branch
      %28 = sbr.rel (0) target = $region9
    $region8: #{tpu_custom_call.1} parent=1 // pred_region
      %30 = vsyncadd [#allocation6], 0
      %s31 = sshll.u32 %s1, 4
      %s32 = int_to_ptr.hbm [resolvable:$true] %s31
      %s33 = sshll.u32 [#allocation5], 4
      %s34 = int_to_ptr.vmem [resolvable:$true] %s33
      %39 = dma.hbm_to_vmem [thread:$0]  %s32, 512, %s34, [#allocation6], 128, 128, 8
    $region9: #{tpu_custom_call.1} parent=1 // pred_fallthru
      _
    // Predicated region
    $region10: #{tpu_custom_call.1} parent=1 // pred_check
      _
    $region11: #{tpu_custom_call.1} parent=1 // pred_check_branch
      %41 = sbr.rel (0) target = $region13
    $region12: #{tpu_custom_call.1} parent=1 // pred_region
      _
    $region13: #{tpu_custom_call.1} parent=1 // pred_fallthru
      _
    // Predicated region
    $region14: #{tpu_custom_call.1} parent=1 // pred_check
      _
    $region15: #{tpu_custom_call.1} parent=1 // pred_check_branch
      %43 = sbr.rel (0) target = $region17
    $region16: #{tpu_custom_call.1} parent=1 // pred_region
      %45 = vsyncadd [#allocation6], 0
      %s46 = sshll.u32 %s3, 4
      %s47 = int_to_ptr.hbm [resolvable:$true] %s46
      %s48 = sshll.u32 [#allocation7], 4
      %s49 = int_to_ptr.vmem [resolvable:$true] %s48
      %54 = dma.hbm_to_vmem [thread:$0]  %s47, 2048, %s49, [#allocation6], 128, 128, 8
    $region17: #{tpu_custom_call.1} parent=1 // pred_fallthru
      _
    // Predicated region
    $region18: #{tpu_custom_call.1} parent=1 // pred_check
      _
    $region19: #{tpu_custom_call.1} parent=1 // pred_check_branch
      %56 = sbr.rel (0) target = $region21
    $region20: #{tpu_custom_call.1} parent=1 // pred_region
      _
    $region21: #{tpu_custom_call.1} parent=1 // pred_fallthru
      _
    // Predicated region
    $region22: #{tpu_custom_call.1} parent=1 // pred_check
      _
    $region23: #{tpu_custom_call.1} parent=1 // pred_check_branch
      %58 = sbr.rel (0) target = $region25
    $region24: #{tpu_custom_call.1} parent=1 // pred_region
      %60 = dma.done [#allocation3], 128
    $region25: #{tpu_custom_call.1} parent=1 // pred_fallthru
      _
    // Predicated region
    $region26: #{tpu_custom_call.1} parent=1 // pred_check
      _
    $region27: #{tpu_custom_call.1} parent=1 // pred_check_branch
      %62 = sbr.rel (0) target = $region29
    $region28: #{tpu_custom_call.1} parent=1 // pred_region
      %64 = dma.done [#allocation6], 512
    $region29: #{tpu_custom_call.1} parent=1 // pred_fallthru
      _
    // Predicated region
    $region30: #{tpu_custom_call.1} parent=1 // pred_check
      _
    $region31: #{tpu_custom_call.1} parent=1 // pred_check_branch
      %66 = sbr.rel (0) target = $region33
    $region32: #{tpu_custom_call.1} parent=1 // pred_region
      %68 = dma.done [#allocation6], 2048
    $region33: #{tpu_custom_call.1} parent=1 // pred_fallthru
      _
    %v69 = vld [vmem:[#allocation2] sm:$0xff]
    %v70 = vld [vmem:[#allocation5] sm:$0xff]
    %v71 = vld [vmem:[#allocation5 + $0x8] sm:$0xff]
    %v72 = vld [vmem:[#allocation5 + $0x10] sm:$0xff]
    %v73 = vld [vmem:[#allocation5 + $0x18] sm:$0xff]
    %v74 = vld [vmem:[%s2] sm:$0x1]
    %v76 = vperm.slane %v74, 0
    %vm78 = vcmask 261120
    %v80 = vsel %vm78, %v69, 0
    %82 = vmatpush.msra.mxu0 0.0
    %83 = vmatpush.msra.mxu0 0.0
    %84 = vmatpush.msra.mxu0 0.0
    %85 = vmatpush.msra.mxu0 0.0
    %86 = vmatpush.msra.mxu0 0.0
    %87 = vmatpush.msra.mxu0 0.0
    %88 = vmatpush.msra.mxu0 0.0
    %89 = vmatpush.msra.mxu0 0.0
    %90 = vmatpush.msra.mxu0 0.0
    %91 = vmatpush.msra.mxu0 0.0
    %92 = vmatpush.msra.mxu0 0.0
    %93 = vmatpush.msra.mxu0 0.0
    %94 = vmatpush.msra.mxu0 %v73
    %95 = vmatpush.msra.mxu0 %v72
    %96 = vmatpush.msra.mxu0 %v71
    %97 = vmatpush.msra.mxu0 %v70
    %98 = vmatmul.f32.gmra.mxu0 %v80
    %v99 = vpop.f32.mrf.mxu0
    %v100 = vadd.f32 %v76, %v99
    %101 = vdwg.mxu0
    %vm102 = vcmp.gt.f32.partialorder %v100, 0.0
    %v103 = vmul.f32 %v100, 0.01
    %v104 = vsel %vm102, %v100, %v103
    %v105 = vld [vmem:[#allocation7] sm:$0xff]
    %v106 = vld [vmem:[#allocation7 + $0x8] sm:$0xff]
    %v107 = vld [vmem:[#allocation7 + $0x10] sm:$0xff]
    %v108 = vld [vmem:[#allocation7 + $0x18] sm:$0xff]
    %v109 = vld [vmem:[#allocation7 + $0x20] sm:$0xff]
    %v110 = vld [vmem:[#allocation7 + $0x28] sm:$0xff]
    %v111 = vld [vmem:[#allocation7 + $0x30] sm:$0xff]
    %v112 = vld [vmem:[#allocation7 + $0x38] sm:$0xff]
    %v113 = vld [vmem:[#allocation7 + $0x40] sm:$0xff]
    %v114 = vld [vmem:[#allocation7 + $0x48] sm:$0xff]
    %v115 = vld [vmem:[#allocation7 + $0x50] sm:$0xff]
    %v116 = vld [vmem:[#allocation7 + $0x58] sm:$0xff]
    %v117 = vld [vmem:[#allocation7 + $0x60] sm:$0xff]
    %v118 = vld [vmem:[#allocation7 + $0x68] sm:$0xff]
    %v119 = vld [vmem:[#allocation7 + $0x70] sm:$0xff]
    %v120 = vld [vmem:[#allocation7 + $0x78] sm:$0xff]
    %v121 = vld [vmem:[%s4] sm:$0x1]
    %v123 = vperm.slane %v121, 0
    %125 = vmatpush.msra.mxu0 %v120
    %126 = vmatpush.msra.mxu0 %v119
    %127 = vmatpush.msra.mxu0 %v118
    %128 = vmatpush.msra.mxu0 %v117
    %129 = vmatpush.msra.mxu0 %v116
    %130 = vmatpush.msra.mxu0 %v115
    %131 = vmatpush.msra.mxu0 %v114
    %132 = vmatpush.msra.mxu0 %v113
    %133 = vmatpush.msra.mxu0 %v112
    %134 = vmatpush.msra.mxu0 %v111
    %135 = vmatpush.msra.mxu0 %v110
    %136 = vmatpush.msra.mxu0 %v109
    %137 = vmatpush.msra.mxu0 %v108
    %138 = vmatpush.msra.mxu0 %v107
    %139 = vmatpush.msra.mxu0 %v106
    %140 = vmatpush.msra.mxu0 %v105
    %141 = vmatmul.f32.gmra.mxu0 %v104
    %v142 = vpop.f32.mrf.mxu0
    %v143 = vadd.f32 %v123, %v142
    %144 = vdwg.mxu0
    %145 = vst [vmem:[#allocation9] sm:$0xff] %v143
    %v146 = vlaneseq
    %v147 = vand.u32 %v146, 127
    %vm148 = vcmp.lt.s32.totalorder %v147, 4
    %v149 = vsel %vm148, %v143, -inf
    %150 = vmax.xlane.f32.xlu0 %v149
    %v151 = vpop.xlane.xlu0 %150
    %v152 = vsub.f32 %v149, %v151
    %v153 = vmul.f32 %v152, 1.442695
    %v154 = vpow.pop %v153
    %155 = vadd.xlane.f32.xlu0 %v154
    %v156 = vpop.xlane.xlu0 %155
    %v157 = vrcp.pop %v156
    %v158 = vmul.f32 %v154, %v157
    %159 = vst [vmem:[#allocation8] sm:$0xff] %v158
    // Predicated region
    $region34: #{tpu_custom_call.1} parent=1 // pred_check
      _
    $region35: #{tpu_custom_call.1} parent=1 // pred_check_branch
      %161 = sbr.rel (0) target = $region37
    $region36: #{tpu_custom_call.1} parent=1 // pred_region
      %163 = vsyncadd [#allocation4], 0
      %s165 = sshll.u32 [#allocation8], 4
      %s166 = int_to_ptr.vmem [resolvable:$true] %s165
      %s167 = sshll.u32 %s5, 4
      %s168 = int_to_ptr.hbm [resolvable:$true] %s167
      %170 = dma.vmem_to_hbm [thread:$0]  %s166, 128, %s168, [#allocation4]
    $region37: #{tpu_custom_call.1} parent=1 // pred_fallthru
      _
    // Predicated region
    $region38: #{tpu_custom_call.1} parent=1 // pred_check
      _
    $region39: #{tpu_custom_call.1} parent=1 // pred_check_branch
      %172 = sbr.rel (0) target = $region41
    $region40: #{tpu_custom_call.1} parent=1 // pred_region
      %174 = vsyncadd [#allocation10], 0
      %s176 = sshll.u32 [#allocation9], 4
      %s177 = int_to_ptr.vmem [resolvable:$true] %s176
      %s178 = sshll.u32 %s6, 4
      %s179 = int_to_ptr.hbm [resolvable:$true] %s178
      %181 = dma.vmem_to_hbm [thread:$0]  %s177, 128, %s179, [#allocation10]
    $region41: #{tpu_custom_call.1} parent=1 // pred_fallthru
      _
    // Predicated region
    $region42: #{tpu_custom_call.1} parent=1 // pred_check
      _
    $region43: #{tpu_custom_call.1} parent=1 // pred_check_branch
      %183 = sbr.rel (0) target = $region45
    $region44: #{tpu_custom_call.1} parent=1 // pred_region
      %185 = dma.done [#allocation4], 128
    $region45: #{tpu_custom_call.1} parent=1 // pred_fallthru
      _
    // Predicated region
    $region46: #{tpu_custom_call.1} parent=1 // pred_check
      _
    $region47: #{tpu_custom_call.1} parent=1 // pred_check_branch
      %187 = sbr.rel (0) target = $region49
    $region48: #{tpu_custom_call.1} parent=1 // pred_region
      %189 = dma.done [#allocation10], 128
    $region49: #{tpu_custom_call.1} parent=1 // pred_fallthru
      _
    %190 = vsyncpa [#allocation3], 1
    %191 = vsyncpa [#allocation6], 1
    %192 = vsyncpa [#allocation4], 1
    %193 = vsyncpa [#allocation10], 1

</llo_original>
